<compile_context>
chip_gen: v5e
topology: v5e:2x2
jax: 0.10.0
libtpu: 0.0.40
codegen_flags: <defaults>
</compile_context>

<pallas_src>
import functools

import jax
import jax.numpy as jnp
from jax import lax
from jax.experimental import pallas as pl
from jax.experimental.pallas import tpu as pltpu

BN_EPS = 1e-5
# Plain Python float on purpose: a jnp array here gets captured as a kernel
# constant and breaks pallas_call tracing.
BIG = 3.0e38
LANE = 128


def _round_up(x, m):
    return ((x + m - 1) // m) * m


def _vmem_capacity_bytes():
    """Physical per-core VMEM; falls back to 128 MiB if the query is unavailable."""
    try:
        info = pltpu.get_tpu_info()
        for name in ("vmem_capacity_bytes", "vmem_bytes", "vmem_size_bytes"):
            v = getattr(info, name, None)
            if v:
                return int(v)
    except Exception:
        pass
    return 128 * 1024 * 1024


# ----------------------------------------------------------------------------
# Kernel A: fused Linear + folded BatchNorm + ReLU      out = relu(x @ W' + t)
# (row-tiled over the sub-sampled cloud; lane-dense padded output width)
# ----------------------------------------------------------------------------
def _mlp_kernel(x_ref, w_ref, t_ref, o_ref):
    y = jnp.dot(x_ref[...], w_ref[...], preferred_element_type=jnp.float32)
    o_ref[...] = jnp.maximum(y + t_ref[...], 0.0)


# ----------------------------------------------------------------------------
# Kernel B: fused [ mlp(x) + knn_interpolate(xs, pos_sub -> pos, k=3) ]
# Queries tiled along the grid; the sub-sampled cloud is fully resident.
#   q_ref : (TQ, 8)  columns [x, y, z, 1, |q|^2, batch, 0, 0]
#   s_ref : (8, Ns)  rows    [-2x, -2y, -2z, |p|^2, 1, batch, 0, 0]
# ----------------------------------------------------------------------------
def _fused_interp_mlp_kernel(x_ref, q_ref, w2_ref, t2_ref, xs_ref, s_ref, o_ref, *, k):
    # ---- second MLP on the high-res tile (MXU, lane-dense output) ------------
    y = jnp.dot(x_ref[...], w2_ref[...], preferred_element_type=jnp.float32)
    y = jnp.maximum(y + t2_ref[...], 0.0)                         # (TQ, Cpad)

    # ---- squared distances via a single MXU matmul ---------------------------
    q = q_ref[...]                                                # (TQ, 8)
    s = s_ref[...]                                                # (8, Ns)
    d = jnp.dot(q[:, :5], s[:5, :], preferred_element_type=jnp.float32)
    d = jnp.maximum(d, 0.0)                                       # cancellation guard

    # mask out sub points belonging to a different graph in the batch
    same = jnp.abs(q[:, 5:6] - s[5:6, :]) < 0.5                   # (TQ, Ns)
    d = jnp.where(same, d, BIG)

    # ---- top-k IDW selection: one cross-lane min per neighbour ---------------
    # (exact-tie distances would be double-selected; fine for generic clouds)
    wsel = jnp.zeros_like(d)                                      # weighted one-hot rows
    wsum = jnp.zeros((d.shape[0], 1), jnp.float32)
    for _ in range(k):
        dmin = jnp.min(d, axis=1, keepdims=True)                  # (TQ, 1)
        w = jnp.where(dmin < 0.5 * BIG,                           # masked/exhausted -> 0
                      1.0 / jnp.maximum(dmin, 1e-16), 0.0)
        sel = d == dmin
        wsel = wsel + w * sel.astype(jnp.float32)
        wsum = wsum + w
        d = jnp.where(sel, BIG, d)                                # drop chosen

    # single MXU matmul gathers + weights all k neighbours at once
    interp = jnp.dot(wsel, xs_ref[...], preferred_element_type=jnp.float32)  # (TQ, Cpad)
    inv = pl.reciprocal(jnp.maximum(wsum, 1e-16))                 # (TQ, 1), exact
    o_ref[...] = y + interp * inv


# ----------------------------------------------------------------------------
# TransitionUp wrapper (parameter folding / packing is plain-JAX glue)
# ----------------------------------------------------------------------------
def fold_bn(w, b, gamma, beta, mean, var):
    """Fold Linear bias + eval-mode BatchNorm1d into the weight and a shift."""
    s = gamma / jnp.sqrt(var + BN_EPS)                    # (Cout,)
    w_t = (w * s[:, None]).T.astype(jnp.float32)          # (Cin, Cout): BN scale folded
    t = ((b - mean) * s + beta).reshape(1, -1).astype(jnp.float32)
    return w_t, t


def transition_up(params, x, x_sub, pos, pos_sub, batch, batch_sub, k=3):
    (w1, t1), (w2, t2) = params
    n, cout = x.shape
    ns, cin = x_sub.shape
    c_pad = _round_up(cout, LANE)

    # zero-pad output channels to a lane-dense width (sliced off at the end)
    w1p = jnp.pad(w1, ((0, 0), (0, c_pad - cout)))
    t1p = jnp.pad(t1, ((0, 0), (0, c_pad - cout)))
    w2p = jnp.pad(w2, ((0, 0), (0, c_pad - cout)))
    t2p = jnp.pad(t2, ((0, 0), (0, c_pad - cout)))

    # generation-aware tile size / VMEM budget
    vmem_cap = _vmem_capacity_bytes()
    small_vmem = vmem_cap <= 64 * 1024 * 1024             # v7x-class parts
    base_tq = 128 if small_vmem else 256
    vmem_limit = int(min(vmem_cap - 16 * 1024 * 1024, 64 * 1024 * 1024))

    # ---- stage 1: mlp_sub on the sub-sampled features (row-tiled) -----------
    ns_pad = _round_up(ns, LANE)
    x_sub_p = jnp.pad(x_sub.astype(jnp.float32), ((0, ns_pad - ns), (0, 0)))
    tile_ns = 256 if ns_pad % 256 == 0 else 128
    xs = pl.pallas_call(
        _mlp_kernel,
        out_shape=jax.ShapeDtypeStruct((ns_pad, c_pad), jnp.float32),
        grid_spec=pltpu.PrefetchScalarGridSpec(
            num_scalar_prefetch=0,
            grid=(ns_pad // tile_ns,),
            in_specs=[
                pl.BlockSpec((tile_ns, cin), lambda i: (i, 0)),
                pl.BlockSpec((cin, c_pad), lambda i: (0, 0)),
                pl.BlockSpec((1, c_pad), lambda i: (0, 0)),
            ],
            out_specs=pl.BlockSpec((tile_ns, c_pad), lambda i: (i, 0)),
        ),
        compiler_params=pltpu.CompilerParams(
            dimension_semantics=("parallel",),
            vmem_limit_bytes=vmem_limit,
        ),
    )(x_sub_p, w1p, t1p)

    # ---- stage 2: fused knn-interpolation + mlp + residual add ---------------
    # packed sub stream: rows [-2x, -2y, -2z, |p|^2, 1, batch, 0, 0]  -> (8, Ns)
    pos_sub_f = pos_sub.astype(jnp.float32)
    psq = jnp.sum(pos_sub_f * pos_sub_f, axis=1)
    bs_f = (batch_sub.astype(jnp.float32) if batch_sub is not None
            else jnp.zeros((ns,), jnp.float32))
    s_stream = jnp.concatenate([
        (-2.0 * pos_sub_f).T,
        psq[None, :],
        jnp.ones((1, ns), jnp.float32),
        bs_f[None, :],
        jnp.zeros((2, ns), jnp.float32),
    ], axis=0)
    s_stream = jnp.pad(s_stream, ((0, 0), (0, ns_pad - ns)))
    if ns_pad > ns:                                       # padded sub rows match nothing
        s_stream = s_stream.at[5, ns:].set(-1.0)

    # packed query stream: columns [x, y, z, 1, |q|^2, batch, 0, 0]  -> (N, 8)
    pos_f = pos.astype(jnp.float32)
    qsq = jnp.sum(pos_f * pos_f, axis=1, keepdims=True)
    bq_f = (batch.astype(jnp.float32)[:, None] if batch is not None
            else jnp.zeros((n, 1), jnp.float32))
    q_stream = jnp.concatenate([
        pos_f,
        jnp.ones((n, 1), jnp.float32),
        qsq,
        bq_f,
        jnp.zeros((n, 2), jnp.float32),
    ], axis=1)

    # query-row tiling: big tiles, but always >= 2 grid steps when possible
    tile_q = min(base_tq, _round_up(max(n // 2, 1), 8))
    n_pad = _round_up(n, tile_q)
    xq = jnp.pad(x.astype(jnp.float32), ((0, n_pad - n), (0, 0)))
    q_stream = jnp.pad(q_stream, ((0, n_pad - n), (0, 0)))
    if n_pad > n:                                         # padded query rows match nothing real
        q_stream = q_stream.at[n:, 5].set(-1.0)

    out = pl.pallas_call(
        functools.partial(_fused_interp_mlp_kernel, k=k),
        out_shape=jax.ShapeDtypeStruct((n_pad, c_pad), jnp.float32),
        grid_spec=pltpu.PrefetchScalarGridSpec(
            num_scalar_prefetch=0,
            grid=(n_pad // tile_q,),
            in_specs=[
                pl.BlockSpec((tile_q, cout), lambda i: (i, 0)),    # x tile (hi-res feats)
                pl.BlockSpec((tile_q, 8), lambda i: (i, 0)),       # packed query stream
                pl.BlockSpec((cout, c_pad), lambda i: (0, 0)),     # W2' (resident)
                pl.BlockSpec((1, c_pad), lambda i: (0, 0)),        # t2  (resident)
                pl.BlockSpec((ns_pad, c_pad), lambda i: (0, 0)),   # xs  (resident feat table)
                pl.BlockSpec((8, ns_pad), lambda i: (0, 0)),       # packed sub stream (resident)
            ],
            out_specs=pl.BlockSpec((tile_q, c_pad), lambda i: (i, 0)),
        ),
        compiler_params=pltpu.CompilerParams(
            dimension_semantics=("parallel",),
            vmem_limit_bytes=vmem_limit,
        ),
    )(xq, q_stream, w2p, t2p, xs, s_stream)
    return out[:n, :cout]


# ----------------------------------------------------------------------------
# Pure-JAX reference for verification
# ----------------------------------------------------------------------------
def ref_transition_up(raw, x, x_sub, pos, pos_sub, batch, batch_sub):
    def mlp(h, w, b, gamma, beta, mean, var):
        z = h @ w.T + b
        z = (z - mean) / jnp.sqrt(var + BN_EPS) * gamma + beta
        return jnp.maximum(z, 0.0)

    (w1, b1, g1, be1, m1, v1), (w2, b2, g2, be2, m2, v2) = raw
    xs = mlp(x_sub, w1, b1, g1, be1, m1, v1)
    d = jnp.sum((pos[:, None, :] - pos_sub[None, :, :]) ** 2, axis=-1)
    d = jnp.where(batch[:, None] == batch_sub[None, :], d, jnp.inf)
    neg_d, idx = lax.top_k(-d, 3)
    dk = -neg_d
    w = 1.0 / jnp.maximum(dk, 1e-16)
    interp = jnp.sum(w[..., None] * xs[idx], axis=1) / jnp.sum(w, axis=1, keepdims=True)
    return mlp(x, w2, b2, g2, be2, m2, v2) + interp


if __name__ == "__main__":
    key = jax.random.PRNGKey(0)
    N, N_SUB = 64, 32          # high-res / sub-sampled point counts
    C_IN, C_OUT = 32, 16       # in_channels / out_channels

    ks = jax.random.split(key, 16)
    x = jax.random.normal(ks[0], (N, C_OUT), jnp.float32)       # x already has out_channels
    x_sub = jax.random.normal(ks[1], (N_SUB, C_IN), jnp.float32)
    pos = jax.random.normal(ks[2], (N, 3), jnp.float32)
    pos_sub = jax.random.normal(ks[3], (N_SUB, 3), jnp.float32)
    # two graphs in the batch (sorted by batch id, as torch_geometric expects)
    batch = jnp.concatenate([jnp.zeros(N // 2, jnp.int32), jnp.ones(N // 2, jnp.int32)])
    batch_sub = jnp.concatenate([jnp.zeros(N_SUB // 2, jnp.int32), jnp.ones(N_SUB // 2, jnp.int32)])

    # deterministic parameters:
    #   mlp_sub = Linear(C_IN,C_OUT)+BN+ReLU ; mlp = Linear(C_OUT,C_OUT)+BN+ReLU
    def make_raw(kw, kb, kg, kbe, km, kv, cin, cout):
        w = jax.random.normal(kw, (cout, cin), jnp.float32) * 0.1
        b = jax.random.normal(kb, (cout,), jnp.float32) * 0.1
        gamma = 1.0 + 0.1 * jax.random.normal(kg, (cout,), jnp.float32)
        beta = 0.1 * jax.random.normal(kbe, (cout,), jnp.float32)
        mean = 0.1 * jax.random.normal(km, (cout,), jnp.float32)
        var = jax.random.uniform(kv, (cout,), jnp.float32, 0.5, 1.5)
        return (w, b, gamma, beta, mean, var)

    raw1 = make_raw(*ks[4:10], C_IN, C_OUT)
    raw2 = make_raw(*ks[10:16], C_OUT, C_OUT)
    params = (fold_bn(*raw1), fold_bn(*raw2))

    out = transition_up(params, x, x_sub, pos, pos_sub, batch, batch_sub)
    out = jax.block_until_ready(out)

    ref = ref_transition_up((raw1, raw2), x, x_sub, pos, pos_sub, batch, batch_sub)
    assert out.shape == (N, C_OUT)
    assert jnp.allclose(out, ref, rtol=1e-4, atol=1e-4), float(jnp.max(jnp.abs(out - ref)))

    print("KERNEL_OK")
</pallas_src>

<mosaic_0001>
module attributes {stable_mosaic.version = 11 : i64} {
  func.func @_mlp_kernel(%arg0: i32, %arg1: memref<128x32xf32, #tpu.memory_space<vmem>>, %arg2: memref<32x128xf32, #tpu.memory_space<vmem>>, %arg3: memref<1x128xf32, #tpu.memory_space<vmem>>, %arg4: memref<128x128xf32, #tpu.memory_space<vmem>>) attributes {dimension_semantics = [#tpu.dimension_semantics<parallel>], iteration_bounds = array<i64: 1>, scalar_prefetch = 0 : i64, scratch_operands = 0 : i64, tpu.core_type = #tpu.core_type<tc>, window_params = [{transform_indices = @transform_0, window_bounds = array<i64: 128, 32>}, {pipeline_mode = #tpu.pipeline_mode<synchronous>, transform_indices = @transform_1, window_bounds = array<i64: 32, 128>}, {pipeline_mode = #tpu.pipeline_mode<synchronous>, transform_indices = @transform_2, window_bounds = array<i64: 1, 128>}, {transform_indices = @transform_3, window_bounds = array<i64: 128, 128>}]} {
    %c0 = arith.constant 0 : index
    %c0_0 = arith.constant 0 : index
    %0 = vector.load %arg1[%c0, %c0_0] : memref<128x32xf32, #tpu.memory_space<vmem>>, vector<128x32xf32>
    %c0_1 = arith.constant 0 : index
    %c0_2 = arith.constant 0 : index
    %1 = vector.load %arg2[%c0_1, %c0_2] : memref<32x128xf32, #tpu.memory_space<vmem>>, vector<32x128xf32>
    %cst = arith.constant dense<0.000000e+00> : vector<128x128xf32>
    %2 = tpu.matmul %0, %1, %cst {dimension_numbers = #tpu.dot_dimension_numbers<[1], [0], [0], [1], [0, 0, 1, 1], [], []>} : vector<128x32xf32>, vector<32x128xf32>, vector<128x128xf32> -> vector<128x128xf32>
    %c0_3 = arith.constant 0 : index
    %c0_4 = arith.constant 0 : index
    %3 = vector.load %arg3[%c0_3, %c0_4] : memref<1x128xf32, #tpu.memory_space<vmem>>, vector<1x128xf32>
    %4 = vector.broadcast %3 : vector<1x128xf32> to vector<128x128xf32>
    %5 = arith.addf %2, %4 : vector<128x128xf32>
    %cst_5 = arith.constant 0.000000e+00 : f32
    %6 = vector.broadcast %cst_5 : f32 to vector<128x128xf32>
    %7 = arith.maximumf %5, %6 : vector<128x128xf32>
    %c0_6 = arith.constant 0 : index
    %c0_7 = arith.constant 0 : index
    %8 = vector.load %arg4[%c0_6, %c0_7] : memref<128x128xf32, #tpu.memory_space<vmem>>, vector<128x128xf32>
    tpu.vector_store %arg4[%c0_6, %c0_7], %7 {strides = array<i32>} : memref<128x128xf32, #tpu.memory_space<vmem>>, vector<128x128xf32>,
    return
  }
  func.func @transform_0(%arg0: i32) -> (i32, i32) {
    %c0_i32 = arith.constant 0 : i32
    %c0_i32_0 = arith.constant 0 : i32
    return %arg0, %c0_i32 : i32, i32
  }
  func.func @transform_1(%arg0: i32) -> (i32, i32) {
    %c0_i32 = arith.constant 0 : i32
    %c0_i32_0 = arith.constant 0 : i32
    %c0_i32_1 = arith.constant 0 : i32
    return %c0_i32, %c0_i32_0 : i32, i32
  }
  func.func @transform_2(%arg0: i32) -> (i32, i32) {
    %c0_i32 = arith.constant 0 : i32
    %c0_i32_0 = arith.constant 0 : i32
    %c0_i32_1 = arith.constant 0 : i32
    return %c0_i32, %c0_i32_0 : i32, i32
  }
  func.func @transform_3(%arg0: i32) -> (i32, i32) {
    %c0_i32 = arith.constant 0 : i32
    %c0_i32_0 = arith.constant 0 : i32
    return %arg0, %c0_i32 : i32, i32
  }
}

</mosaic_0001>

<llo_original>
// kernel: tpu_custom_call.1
$region0: #{tpu_custom_call.1}
  #allocation0 [shape = 'u32[]', space=smem, size = 0x4, offset = 0x4, fixed_abs, tag = 'smem constant byte address 0x4 - core index']
  #allocation1 [shape = 'u32[72,128]{1,0:T(1,128)}', space=vmem, size = 0x9000, scoped, tag = 'internal scratch']
  %s0 = inlined_call_operand.vmem [shape: f32[128,32], index: 0, kind: input, shape index: {}]
  %s1 = inlined_call_operand.vmem [shape: f32[32,128], index: 1, kind: input, shape index: {}]
  %s2 = inlined_call_operand.vmem [shape: f32[1,128], index: 2, kind: input, shape index: {}]
  %s3 = inlined_call_operand.hbm [shape: f32[128,128], index: 3, kind: output, shape index: {}]
  %s4 = sld [smem:[#allocation0]]
  $region22: #{tpu_custom_call.1} parent=0
    _
  %s6 = ssub.s32 1, %s4
  %s7 = scalar_select 0, %s6, %s4
  $region1: #{tpu_custom_call.1} parent=0
    #allocation2 [shape = 'u8[65536]{0}', space=vmem, size = 0x10000, scoped, tag = 'output window, operand 0, single buffered']
    #allocation3 [shape = 's32[1]{0}', space=sflag, size = 0x4, scoped, tag = 'scoped memory for tpu_custom_call.1']
    %8 = vsyncpa [#allocation3], 0
    // Predicated region
    $region2: #{tpu_custom_call.1} parent=1 // pred_check
      _
    $region3: #{tpu_custom_call.1} parent=1 // pred_check_branch
      %10 = sbr.rel (0) target = $region5
    $region4: #{tpu_custom_call.1} parent=1 // pred_region
      _
    $region5: #{tpu_custom_call.1} parent=1 // pred_fallthru
      _
    // Predicated region
    $region6: #{tpu_custom_call.1} parent=1 // pred_check
      _
    $region7: #{tpu_custom_call.1} parent=1 // pred_check_branch
      %12 = sbr.rel (0) target = $region9
    $region8: #{tpu_custom_call.1} parent=1 // pred_region
      _
    $region9: #{tpu_custom_call.1} parent=1 // pred_fallthru
      _
    // Predicated region
    $region10: #{tpu_custom_call.1} parent=1 // pred_check
      _
    $region11: #{tpu_custom_call.1} parent=1 // pred_check_branch
      %14 = sbr.rel (0) target = $region13
    $region12: #{tpu_custom_call.1} parent=1 // pred_region
      _
    $region13: #{tpu_custom_call.1} parent=1 // pred_fallthru
      _
    %v15 = vld [vmem:[%s0] sm:$0xff]
    %v16 = vld [vmem:[%s0 + $0x8] sm:$0xff]
    %v17 = vld [vmem:[%s0 + $0x10] sm:$0xff]
    %v18 = vld [vmem:[%s0 + $0x18] sm:$0xff]
    %v19 = vld [vmem:[%s0 + $0x20] sm:$0xff]
    %v20 = vld [vmem:[%s0 + $0x28] sm:$0xff]
    %v21 = vld [vmem:[%s0 + $0x30] sm:$0xff]
    %v22 = vld [vmem:[%s0 + $0x38] sm:$0xff]
    %v23 = vld [vmem:[%s0 + $0x40] sm:$0xff]
    %v24 = vld [vmem:[%s0 + $0x48] sm:$0xff]
    %v25 = vld [vmem:[%s0 + $0x50] sm:$0xff]
    %v26 = vld [vmem:[%s0 + $0x58] sm:$0xff]
    %v27 = vld [vmem:[%s0 + $0x60] sm:$0xff]
    %v28 = vld [vmem:[%s0 + $0x68] sm:$0xff]
    %v29 = vld [vmem:[%s0 + $0x70] sm:$0xff]
    %v30 = vld [vmem:[%s0 + $0x78] sm:$0xff]
    %v31 = vld [vmem:[%s1] sm:$0xff]
    %v32 = vld [vmem:[%s1 + $0x8] sm:$0xff]
    %v33 = vld [vmem:[%s1 + $0x10] sm:$0xff]
    %v34 = vld [vmem:[%s1 + $0x18] sm:$0xff]
    %v35 = vld [vmem:[%s2] sm:$0x1]
    %v37 = vperm.slane %v35, 0
    %vm39 = vcmask 261120
    %v41 = vsel %vm39, %v15, 0
    %v44 = vsel %vm39, %v16, 0
    %v47 = vsel %vm39, %v17, 0
    %v50 = vsel %vm39, %v18, 0
    %v53 = vsel %vm39, %v19, 0
    %v56 = vsel %vm39, %v20, 0
    %v59 = vsel %vm39, %v21, 0
    %v62 = vsel %vm39, %v22, 0
    %v65 = vsel %vm39, %v23, 0
    %v68 = vsel %vm39, %v24, 0
    %v71 = vsel %vm39, %v25, 0
    %v74 = vsel %vm39, %v26, 0
    %v77 = vsel %vm39, %v27, 0
    %v80 = vsel %vm39, %v28, 0
    %v83 = vsel %vm39, %v29, 0
    %v86 = vsel %vm39, %v30, 0
    %88 = vmatpush.msra.mxu0 0.0
    %89 = vmatpush.msra.mxu0 0.0
    %90 = vmatpush.msra.mxu0 0.0
    %91 = vmatpush.msra.mxu0 0.0
    %92 = vmatpush.msra.mxu0 0.0
    %93 = vmatpush.msra.mxu0 0.0
    %94 = vmatpush.msra.mxu0 0.0
    %95 = vmatpush.msra.mxu0 0.0
    %96 = vmatpush.msra.mxu0 0.0
    %97 = vmatpush.msra.mxu0 0.0
    %98 = vmatpush.msra.mxu0 0.0
    %99 = vmatpush.msra.mxu0 0.0
    %100 = vmatpush.msra.mxu0 %v34
    %101 = vmatpush.msra.mxu0 %v33
    %102 = vmatpush.msra.mxu0 %v32
    %103 = vmatpush.msra.mxu0 %v31
    %104 = vmatmul.f32.gmra.mxu0 %v41
    %v105 = vpop.f32.mrf.mxu0
    %v106 = vadd.f32 %v37, %v105
    %107 = vmatmul.f32.gmra.mxu0 %v44
    %v108 = vpop.f32.mrf.mxu0
    %v109 = vadd.f32 %v37, %v108
    %110 = vmatmul.f32.gmra.mxu0 %v47
    %v111 = vpop.f32.mrf.mxu0
    %v112 = vadd.f32 %v37, %v111
    %113 = vmatmul.f32.gmra.mxu0 %v50
    %v114 = vpop.f32.mrf.mxu0
    %v115 = vadd.f32 %v37, %v114
    %116 = vmatmul.f32.gmra.mxu0 %v53
    %v117 = vpop.f32.mrf.mxu0
    %v118 = vadd.f32 %v37, %v117
    %119 = vmatmul.f32.gmra.mxu0 %v56
    %v120 = vpop.f32.mrf.mxu0
    %v121 = vadd.f32 %v37, %v120
    %122 = vmatmul.f32.gmra.mxu0 %v59
    %v123 = vpop.f32.mrf.mxu0
    %v124 = vadd.f32 %v37, %v123
    %125 = vmatmul.f32.gmra.mxu0 %v62
    %v126 = vpop.f32.mrf.mxu0
    %v127 = vadd.f32 %v37, %v126
    %128 = vmatmul.f32.gmra.mxu0 %v65
    %v129 = vpop.f32.mrf.mxu0
    %v130 = vadd.f32 %v37, %v129
    %131 = vmatmul.f32.gmra.mxu0 %v68
    %v132 = vpop.f32.mrf.mxu0
    %v133 = vadd.f32 %v37, %v132
    %134 = vmatmul.f32.gmra.mxu0 %v71
    %v135 = vpop.f32.mrf.mxu0
    %v136 = vadd.f32 %v37, %v135
    %137 = vmatmul.f32.gmra.mxu0 %v74
    %v138 = vpop.f32.mrf.mxu0
    %v139 = vadd.f32 %v37, %v138
    %140 = vmatmul.f32.gmra.mxu0 %v77
    %v141 = vpop.f32.mrf.mxu0
    %v142 = vadd.f32 %v37, %v141
    %143 = vmatmul.f32.gmra.mxu0 %v80
    %v144 = vpop.f32.mrf.mxu0
    %v145 = vadd.f32 %v37, %v144
    %146 = vmatmul.f32.gmra.mxu0 %v83
    %v147 = vpop.f32.mrf.mxu0
    %v148 = vadd.f32 %v37, %v147
    %149 = vmatmul.f32.gmra.mxu0 %v86
    %v150 = vpop.f32.mrf.mxu0
    %v151 = vadd.f32 %v37, %v150
    %152 = vdwg.mxu0
    %v153 = vmax.f32 %v106, 0.0
    %v154 = vmax.f32 %v109, 0.0
    %v155 = vmax.f32 %v112, 0.0
    %v156 = vmax.f32 %v115, 0.0
    %v157 = vmax.f32 %v118, 0.0
    %v158 = vmax.f32 %v121, 0.0
    %v159 = vmax.f32 %v124, 0.0
    %v160 = vmax.f32 %v127, 0.0
    %v161 = vmax.f32 %v130, 0.0
    %v162 = vmax.f32 %v133, 0.0
    %v163 = vmax.f32 %v136, 0.0
    %v164 = vmax.f32 %v139, 0.0
    %v165 = vmax.f32 %v142, 0.0
    %v166 = vmax.f32 %v145, 0.0
    %v167 = vmax.f32 %v148, 0.0
    %v168 = vmax.f32 %v151, 0.0
    %169 = vst [vmem:[#allocation2] sm:$0xff] %v153
    %170 = vst [vmem:[#allocation2 + $0x8] sm:$0xff] %v154
    %171 = vst [vmem:[#allocation2 + $0x10] sm:$0xff] %v155
    %172 = vst [vmem:[#allocation2 + $0x18] sm:$0xff] %v156
    %173 = vst [vmem:[#allocation2 + $0x20] sm:$0xff] %v157
    %174 = vst [vmem:[#allocation2 + $0x28] sm:$0xff] %v158
    %175 = vst [vmem:[#allocation2 + $0x30] sm:$0xff] %v159
    %176 = vst [vmem:[#allocation2 + $0x38] sm:$0xff] %v160
    %177 = vst [vmem:[#allocation2 + $0x40] sm:$0xff] %v161
    %178 = vst [vmem:[#allocation2 + $0x48] sm:$0xff] %v162
    %179 = vst [vmem:[#allocation2 + $0x50] sm:$0xff] %v163
    %180 = vst [vmem:[#allocation2 + $0x58] sm:$0xff] %v164
    %181 = vst [vmem:[#allocation2 + $0x60] sm:$0xff] %v165
    %182 = vst [vmem:[#allocation2 + $0x68] sm:$0xff] %v166
    %183 = vst [vmem:[#allocation2 + $0x70] sm:$0xff] %v167
    %184 = vst [vmem:[#allocation2 + $0x78] sm:$0xff] %v168
    // Predicated region
    $region14: #{tpu_custom_call.1} parent=1 // pred_check
      _
    $region15: #{tpu_custom_call.1} parent=1 // pred_check_branch
      %186 = sbr.rel (0) target = $region17
    $region16: #{tpu_custom_call.1} parent=1 // pred_region
      %188 = vsyncadd [#allocation3], 0
      %s189 = sshll.u32 [#allocation2], 4
      %s190 = int_to_ptr.vmem [resolvable:$true] %s189
      %s191 = sshll.u32 %s3, 4
      %s192 = int_to_ptr.hbm [resolvable:$true] %s191
      %197 = dma.vmem_to_hbm [thread:$0]  %s190, 2048, %s192, [#allocation3], 128, 128, 8
    $region17: #{tpu_custom_call.1} parent=1 // pred_fallthru
      _
    // Predicated region
    $region18: #{tpu_custom_call.1} parent=1 // pred_check
      _
    $region19: #{tpu_custom_call.1} parent=1 // pred_check_branch
      %199 = sbr.rel (0) target = $region21
    $region20: #{tpu_custom_call.1} parent=1 // pred_region
      %201 = dma.done [#allocation3], 2048
    $region21: #{tpu_custom_call.1} parent=1 // pred_fallthru
      _
    %202 = vsyncpa [#allocation3], 1

</llo_original>
